<compile_context>
chip_gen: v6e
topology: v6e:2x2x1
jax: 0.10.0
libtpu: 0.0.40
codegen_flags: <defaults>
</compile_context>

<pallas_src>
import functools

import jax
import jax.numpy as jnp
from jax.experimental import pallas as pl
from jax.experimental.pallas import tpu as pltpu

_LANES = 128
_SUBLANES = 8
_ROW_ELEMS = _SUBLANES * _LANES  # 1024


def _charbonnier_tile_kernel(x_ref, y_ref, out_ref, *, eps2, num_tiles,
                             rows_last, tile_rows):
    """One grid step: partial sum of sqrt(diff^2 + eps^2) over a (tile_rows, 128) tile.

    Writes an (8, 128) f32 partial for this tile (in-tile reduce is pure VALU).
    """
    diff = x_ref[...].astype(jnp.float32) - y_ref[...].astype(jnp.float32)
    d2 = diff * diff + jnp.float32(eps2)
    # sqrt(d2) == d2 * rsqrt(d2); rsqrt is a single EUP op (its own VLIW slot)
    # and d2 >= eps^2 > 0, so this is safe and exact to ~1 ulp.
    val = d2 * jax.lax.rsqrt(d2)

    def _reduce_and_store(v):
        # (tile_rows,128) -> (tile_rows/8, 8, 128) is a pure view of the native
        # (8,128) tiling; the axis-0 sum is vreg-wise VALU adds (no XLU).
        out_ref[...] = v.reshape(-1, _SUBLANES, _LANES).sum(axis=0)

    if rows_last < tile_rows:
        # Only the last tile is a partial (boundary) block; rows >= rows_last
        # there are Pallas OOB padding (garbage, possibly NaN) and are zeroed by
        # the select.  pl.when-gated so every other tile pays nothing.
        is_last = pl.program_id(0) == num_tiles - 1

        @pl.when(is_last)
        def _():
            row = jax.lax.broadcasted_iota(jnp.int32, val.shape, 0)
            _reduce_and_store(jnp.where(row < rows_last, val, jnp.float32(0.0)))

        @pl.when(jnp.logical_not(is_last))
        def _():
            _reduce_and_store(val)
    else:
        _reduce_and_store(val)


def charbonnier_loss(x, y, eps=1e-3, tile_rows=4096, xla_fallback_elems=262_144):
    """mean(sqrt((x - y)^2 + eps^2)) -> f32 scalar (Pallas TPU implementation)."""
    assert x.shape == y.shape, "x and y must have the same shape"
    n = int(x.size)
    eps = float(eps)
    eps2 = eps * eps

    def _xla_sum(xx, yy):
        d = xx.astype(jnp.float32) - yy.astype(jnp.float32)
        d2 = d * d + jnp.float32(eps2)
        return jnp.sum(jnp.sqrt(d2), dtype=jnp.float32)

    # Largest prefix forming full (8, 128) rows; handled by the Pallas kernel.
    n_main = (n // _ROW_ELEMS) * _ROW_ELEMS
    rows = n_main // _LANES                      # multiple of 8

    # Small-input fast path: plain fused XLA beats kernel-launch overhead.
    if n <= int(xla_fallback_elems) or rows == 0:
        return _xla_sum(x, y) / jnp.float32(n)

    xf = x.reshape(-1)
    yf = y.reshape(-1)

    # <1024-element ragged tail: tiny fused XLA expression.  Keeps ragged-input
    # cost O(tile) instead of the old O(N) jnp.pad copy of both operands.
    tail_sum = jnp.float32(0.0)
    if n_main < n:
        tail_sum = _xla_sum(xf[n_main:], yf[n_main:])

    x2 = xf[:n_main].reshape(rows, _LANES)
    y2 = yf[:n_main].reshape(rows, _LANES)

    # Tile size: multiple of 8 sublanes, capped at 8192 rows (16 MiB of
    # double-buffered f32 input blocks), never larger than the data.
    tile_rows = max(_SUBLANES, (int(tile_rows) // _SUBLANES) * _SUBLANES)
    tile_rows = min(tile_rows, 8192, rows)

    num_tiles = pl.cdiv(rows, tile_rows)
    rows_last = rows - (num_tiles - 1) * tile_rows   # valid rows in last tile

    itemsize = max(jnp.dtype(x.dtype).itemsize, jnp.dtype(y.dtype).itemsize)
    in_buf_bytes = 2 * 2 * tile_rows * _LANES * itemsize  # 2 inputs x 2 buffers
    vmem_limit = int(min(max(2 * in_buf_bytes, 32 << 20), 60 << 20))

    kernel = functools.partial(
        _charbonnier_tile_kernel,
        eps2=eps2, num_tiles=num_tiles, rows_last=rows_last, tile_rows=tile_rows)

    partials = pl.pallas_call(
        kernel,
        out_shape=jax.ShapeDtypeStruct((num_tiles, _SUBLANES, _LANES),
                                       jnp.float32),
        grid=(num_tiles,),
        in_specs=[
            pl.BlockSpec((tile_rows, _LANES), lambda i: (i, 0)),
            pl.BlockSpec((tile_rows, _LANES), lambda i: (i, 0)),
        ],
        out_specs=pl.BlockSpec((None, _SUBLANES, _LANES), lambda i: (i, 0, 0)),
        compiler_params=pltpu.CompilerParams(
            dimension_semantics=("parallel",),
            vmem_limit_bytes=vmem_limit,
        ),
    )(x2, y2)

    # One-time final reduce + mean (each partial already summed <=1024 terms,
    # so f32 accumulation error stays small even for very large n).
    total = jnp.sum(partials, dtype=jnp.float32) + tail_sum
    return total / jnp.float32(n)


if __name__ == "__main__":
    key = jax.random.PRNGKey(0)
    k = jax.random.split(key, 6)

    def ref_loss(x, y, eps=1e-3):
        d = x.astype(jnp.float32) - y.astype(jnp.float32)
        return jnp.mean(jnp.sqrt(d * d + jnp.float32(eps * eps)))

    def check(x, y, **kw):
        got = jax.block_until_ready(charbonnier_loss(x, y, eps=1e-3, **kw))
        want = ref_loss(x, y)
        assert jnp.allclose(got, want, rtol=1e-5, atol=1e-6), (got, want)

    # 1) NCHW, size multiple of 1024: single-tile Pallas path (no mask, no tail).
    x1 = jax.random.normal(k[0], (2, 4, 16, 16), dtype=jnp.float32)
    y1 = jax.random.normal(k[1], (2, 4, 16, 16), dtype=jnp.float32)
    check(x1, y1, xla_fallback_elems=0)

    # 2) Same data, multi-step parallel grid (2 tiles, no mask).
    check(x1, y1, xla_fallback_elems=0, tile_rows=8)

    # 3) Partial boundary tile: rows=24, tile_rows=16 -> last-tile pl.when mask,
    #    plus a <1024-element XLA tail.
    x3 = jax.random.normal(k[2], (2, 3, 32, 20), dtype=jnp.float32)
    y3 = jax.random.normal(k[3], (2, 3, 32, 20), dtype=jnp.float32)
    check(x3, y3, xla_fallback_elems=0, tile_rows=16)

    # 4) Small ragged size: one tile + 131-element XLA tail.
    x4 = jax.random.normal(k[4], (3, 5, 7, 11), dtype=jnp.float32)
    y4 = jax.random.normal(k[5], (3, 5, 7, 11), dtype=jnp.float32)
    check(x4, y4, xla_fallback_elems=0)

    # 5) Default small-input XLA fast path.
    check(x1, y1)

    print("KERNEL_OK")
</pallas_src>

<mosaic_0001>
module attributes {stable_mosaic.version = 11 : i64} {
  func.func @_charbonnier_tile_kernel(%arg0: i32, %arg1: memref<16x128xf32, #tpu.memory_space<vmem>>, %arg2: memref<16x128xf32, #tpu.memory_space<vmem>>, %arg3: memref<1x8x128xf32, #tpu.memory_space<vmem>>) attributes {dimension_semantics = [#tpu.dimension_semantics<parallel>], iteration_bounds = array<i64: 1>, scalar_prefetch = 0 : i64, scratch_operands = 0 : i64, tpu.core_type = #tpu.core_type<tc>, window_params = [{transform_indices = @transform_0, window_bounds = array<i64: 16, 128>}, {transform_indices = @transform_1, window_bounds = array<i64: 16, 128>}, {transform_indices = @transform_2, window_bounds = array<i64: 1, 8, 128>}]} {
    %c0 = arith.constant 0 : index
    %c0_0 = arith.constant 0 : index
    %0 = vector.load %arg1[%c0, %c0_0] : memref<16x128xf32, #tpu.memory_space<vmem>>, vector<16x128xf32>
    %c0_1 = arith.constant 0 : index
    %c0_2 = arith.constant 0 : index
    %1 = vector.load %arg2[%c0_1, %c0_2] : memref<16x128xf32, #tpu.memory_space<vmem>>, vector<16x128xf32>
    %2 = arith.subf %0, %1 : vector<16x128xf32>
    %3 = arith.mulf %2, %2 : vector<16x128xf32>
    %cst = arith.constant 9.99999997E-7 : f32
    %4 = vector.broadcast %cst : f32 to vector<16x128xf32>
    %5 = arith.addf %3, %4 : vector<16x128xf32>
    %6 = math.rsqrt %5 : vector<16x128xf32>
    %7 = arith.mulf %5, %6 : vector<16x128xf32>
    %8 = vector.shape_cast %7 : vector<16x128xf32> to vector<2x8x128xf32>
    %cst_3 = arith.constant dense<0.000000e+00> : vector<8x128xf32>
    %9 = vector.multi_reduction <add>, %8, %cst_3 [0] : vector<2x8x128xf32> to vector<8x128xf32>
    %c0_4 = arith.constant 0 : index
    %c0_5 = arith.constant 0 : index
    %c0_6 = arith.constant 0 : index
    %10 = vector.load %arg3[%c0_4, %c0_5, %c0_6] : memref<1x8x128xf32, #tpu.memory_space<vmem>>, vector<1x8x128xf32>
    %11 = vector.shape_cast %10 : vector<1x8x128xf32> to vector<8x128xf32>
    %12 = vector.shape_cast %9 : vector<8x128xf32> to vector<1x8x128xf32>
    tpu.vector_store %arg3[%c0_4, %c0_5, %c0_6], %12 {strides = array<i32>} : memref<1x8x128xf32, #tpu.memory_space<vmem>>, vector<1x8x128xf32>,
    return
  }
  func.func @transform_0(%arg0: i32) -> (i32, i32) {
    %c0_i32 = arith.constant 0 : i32
    %c0_i32_0 = arith.constant 0 : i32
    return %arg0, %c0_i32 : i32, i32
  }
  func.func @transform_1(%arg0: i32) -> (i32, i32) {
    %c0_i32 = arith.constant 0 : i32
    %c0_i32_0 = arith.constant 0 : i32
    return %arg0, %c0_i32 : i32, i32
  }
  func.func @transform_2(%arg0: i32) -> (i32, i32, i32) {
    %c0_i32 = arith.constant 0 : i32
    %c0_i32_0 = arith.constant 0 : i32
    %c0_i32_1 = arith.constant 0 : i32
    return %arg0, %c0_i32, %c0_i32_0 : i32, i32, i32
  }
}

</mosaic_0001>

<llo_original>
// kernel: tpu_custom_call.1
$region0: #{tpu_custom_call.1}
  #allocation0 [shape = 'u32[]', space=smem, size = 0x4, offset = 0x4, fixed_abs, tag = 'smem constant byte address 0x4 - core index']
  #allocation1 [shape = 'u32[144,128]{1,0:T(1,128)}', space=vmem, size = 0x12000, scoped, tag = 'internal scratch']
  %s0 = inlined_call_operand.hbm [shape: f32[16,128], index: 0, kind: input, shape index: {}]
  %s1 = inlined_call_operand.hbm [shape: f32[16,128], index: 1, kind: input, shape index: {}]
  %s2 = inlined_call_operand.hbm [shape: f32[1,8,128], index: 2, kind: output, shape index: {}]
  %s3 = sld [smem:[#allocation0]]
  $region26: #{tpu_custom_call.1} parent=0
    _
  %s5 = ssub.s32 1, %s3
  %s6 = scalar_select 0, %s5, %s3
  $region1: #{tpu_custom_call.1} parent=0
    #allocation2 [shape = 'u8[8192]{0}', space=vmem, size = 0x2000, scoped, tag = 'input window, operand 0, single buffered']
    #allocation3 [shape = 's32[1]{0}', space=sflag, size = 0x4, scoped, tag = 'scoped memory for tpu_custom_call.1']
    #allocation4 [shape = 's32[1]{0}', space=sflag, size = 0x4, scoped, tag = 'scoped memory for tpu_custom_call.1']
    #allocation5 [shape = 'u8[8192]{0}', space=vmem, size = 0x2000, scoped, tag = 'input window, operand 1, single buffered']
    #allocation6 [shape = 's32[1]{0}', space=sflag, size = 0x4, scoped, tag = 'scoped memory for tpu_custom_call.1']
    #allocation7 [shape = 'u8[4096]{0}', space=vmem, size = 0x1000, scoped, tag = 'output window, operand 0, single buffered']
    %7 = vsyncpa [#allocation3], 0
    %8 = vsyncpa [#allocation6], 0
    %9 = vsyncpa [#allocation4], 0
    // Predicated region
    $region2: #{tpu_custom_call.1} parent=1 // pred_check
      _
    $region3: #{tpu_custom_call.1} parent=1 // pred_check_branch
      %11 = sbr.rel (0) target = $region5
    $region4: #{tpu_custom_call.1} parent=1 // pred_region
      %s13 = ssub.s32 256, 256
      %14 = vsyncadd [#allocation3], %s13
      %s15 = sshll.u32 [#allocation2], 4
      %s16 = int_to_ptr.vmem [resolvable:$true] %s15
      %21 = dma.hbm_to_vmem [thread:$0]  %s0, 256, %s16, [#allocation3], 128, 128, 8
    $region5: #{tpu_custom_call.1} parent=1 // pred_fallthru
      _
    // Predicated region
    $region6: #{tpu_custom_call.1} parent=1 // pred_check
      _
    $region7: #{tpu_custom_call.1} parent=1 // pred_check_branch
      %23 = sbr.rel (0) target = $region9
    $region8: #{tpu_custom_call.1} parent=1 // pred_region
      %s25 = ssub.s32 256, 256
      %26 = vsyncadd [#allocation6], %s25
      %s27 = sshll.u32 [#allocation5], 4
      %s28 = int_to_ptr.vmem [resolvable:$true] %s27
      %33 = dma.hbm_to_vmem [thread:$0]  %s1, 256, %s28, [#allocation6], 128, 128, 8
    $region9: #{tpu_custom_call.1} parent=1 // pred_fallthru
      _
    // Predicated region
    $region10: #{tpu_custom_call.1} parent=1 // pred_check
      _
    $region11: #{tpu_custom_call.1} parent=1 // pred_check_branch
      %35 = sbr.rel (0) target = $region13
    $region12: #{tpu_custom_call.1} parent=1 // pred_region
      %36 = dma.done [#allocation3], 256
    $region13: #{tpu_custom_call.1} parent=1 // pred_fallthru
      _
    // Predicated region
    $region14: #{tpu_custom_call.1} parent=1 // pred_check
      _
    $region15: #{tpu_custom_call.1} parent=1 // pred_check_branch
      %38 = sbr.rel (0) target = $region17
    $region16: #{tpu_custom_call.1} parent=1 // pred_region
      %39 = dma.done [#allocation6], 256
    $region17: #{tpu_custom_call.1} parent=1 // pred_fallthru
      _
    %v40 = vld [vmem:[#allocation2] sm:$0xff]
    %v41 = vld [vmem:[#allocation2 + $0x8] sm:$0xff]
    %v42 = vld [vmem:[#allocation5] sm:$0xff]
    %v43 = vld [vmem:[#allocation5 + $0x8] sm:$0xff]
    %v44 = vsub.f32 %v40, %v42
    %v45 = vsub.f32 %v41, %v43
    %v46 = vmul.f32 %v44, %v44
    %v47 = vmul.f32 %v45, %v45
    %v48 = vadd.f32 %v46, 1e-06
    %v49 = vadd.f32 %v47, 1e-06
    %v50 = vrsqrt.pop %v48
    %v51 = vrsqrt.pop %v49
    %v52 = vmul.f32 %v48, %v50
    %v53 = vmul.f32 %v49, %v51
    %v54 = vadd.f32 %v52, %v53
    %55 = vst [vmem:[#allocation7] sm:$0xff] %v54
    // Predicated region
    $region18: #{tpu_custom_call.1} parent=1 // pred_check
      _
    $region19: #{tpu_custom_call.1} parent=1 // pred_check_branch
      %57 = sbr.rel (0) target = $region21
    $region20: #{tpu_custom_call.1} parent=1 // pred_region
      %s59 = ssub.s32 128, 128
      %60 = vsyncadd [#allocation4], %s59
      %s62 = sshll.u32 [#allocation7], 4
      %s63 = int_to_ptr.vmem [resolvable:$true] %s62
      %65 = dma.vmem_to_hbm [thread:$0]  %s63, 128, %s2, [#allocation4]
    $region21: #{tpu_custom_call.1} parent=1 // pred_fallthru
      _
    // Predicated region
    $region22: #{tpu_custom_call.1} parent=1 // pred_check
      _
    $region23: #{tpu_custom_call.1} parent=1 // pred_check_branch
      %67 = sbr.rel (0) target = $region25
    $region24: #{tpu_custom_call.1} parent=1 // pred_region
      %68 = dma.done [#allocation4], 128
    $region25: #{tpu_custom_call.1} parent=1 // pred_fallthru
      _
    %69 = vsyncpa [#allocation3], 1
    %70 = vsyncpa [#allocation6], 1
    %71 = vsyncpa [#allocation4], 1

</llo_original>
